<compile_context>
chip_gen: v6e
topology: v6e:2x2x1
jax: 0.10.0
libtpu: 0.0.40
codegen_flags: <defaults>
</compile_context>

<pallas_src>
import functools

import jax
import jax.numpy as jnp
from jax.experimental import pallas as pl
from jax.experimental.pallas import tpu as pltpu

BN_EPS = 1e-5  # nn.BatchNorm1d default eps


def _round_up(x, m):
    return ((x + m - 1) // m) * m


def _vmem_capacity_bytes():
    """Per-core VMEM capacity; falls back to the v7x (smallest) value if unknown."""
    try:
        return int(pltpu.get_tpu_info().vmem_capacity_bytes)
    except Exception:
        return 64 * 1024 * 1024


def _pick_tiles(n_pad):
    """Row tile tn and K tile tk: multiples of 128 that divide n_pad (decoupled)."""
    def biggest():
        for t in (512, 256, 128):
            if n_pad % t == 0:
                return t
        return 128

    tk = biggest()
    tn = biggest()
    # Keep >=2 row tiles so v7x's two TensorCores both get work; with X resident this
    # costs nothing on single-TC v5e/v6e (per-step overhead only, X is not re-streamed).
    while tn > 128 and n_pad // tn < 2:
        tn //= 2
    return tn, tk


def _plan_layer(n_pad, fin_pad, fout_pad, tn, tk):
    """Decide X residency and a footprint-derived VMEM budget."""
    cap = _vmem_capacity_bytes()
    cap_limit = (cap * 3) // 4                       # leave headroom for the compiler
    headroom = 4 * 1024 * 1024
    fixed = (2 * tn * tk * 1                         # A int8, double-buffered
             + 2 * tn * 4                            # deg_inv f32
             + 2 * fin_pad * fout_pad * 2            # folded W_l bf16 (fetched once)
             + 2 * tn * fout_pad * 4                 # self_proj f32
             + 2 * tn * fout_pad * 2                 # bf16 output
             + tn * fin_pad * 4)                     # f32 accumulator scratch
    x_resident_bytes = 2 * n_pad * fin_pad * 2       # whole X, bf16 (dbl-buffer alloc)
    x_stream_bytes = 2 * tk * fin_pad * 2
    x_resident = fixed + x_resident_bytes + headroom <= cap_limit
    footprint = fixed + (x_resident_bytes if x_resident else x_stream_bytes)
    vmem_limit = int(min(cap_limit, max(32 * 1024 * 1024, footprint + headroom)))
    return x_resident, vmem_limit


def _sage_block_kernel(a_ref, dinv_ref, x_ref, w_ref, sp_ref, o_ref, acc_ref,
                       *, tk, x_resident):
    # a_ref   : (tn, tk)            int8  un-normalized adjacency (edge counts) tile
    # dinv_ref: (tn, 1)             f32   1/deg for this row tile
    # x_ref   : (n_pad, fin_pad)    bf16  resident features   (x_resident=True)
    #           (tk, fin_pad)       bf16  streamed K-tile      (x_resident=False)
    # w_ref   : (fin_pad, fout_pad) bf16  BN-folded W_l
    # sp_ref  : (tn, fout_pad)      f32   precomputed x @ W_r' + b' (self/root term)
    # o_ref   : (tn, fout_pad)      bf16  output row tile
    # acc_ref : (tn, fin_pad)       f32   aggregation accumulator
    k = pl.program_id(1)

    @pl.when(k == 0)
    def _():
        acc_ref[...] = jnp.zeros_like(acc_ref)

    # int8 counts -> bf16 for the MXU (HBM stream stays 1 byte/elem).
    a = a_ref[...].astype(jnp.float32).astype(jnp.bfloat16)
    if x_resident:
        start = pl.multiple_of(k * tk, tk)
        xk = x_ref[pl.ds(start, tk), :]
    else:
        xk = x_ref[...]
    acc_ref[...] += jnp.dot(a, xk, preferred_element_type=jnp.float32)

    @pl.when(k == pl.num_programs(1) - 1)
    def _():
        # Mean normalization in f32, then the (small) projection epilogue.
        agg = acc_ref[...] * dinv_ref[...]
        h = jnp.dot(agg.astype(jnp.bfloat16), w_ref[...],
                    preferred_element_type=jnp.float32)
        h = h + sp_ref[...]
        o_ref[...] = jnp.maximum(h, 0.0).astype(o_ref.dtype)


def sage_block_forward(a_i8, dinv, x_pad, wl_pad, self_proj, *, tn, tk,
                       x_resident, vmem_limit):
    """One SAGEBlock forward on padded operands. Returns (N_pad, Fout_pad) bf16."""
    n_pad, fin_pad = x_pad.shape
    fout_pad = wl_pad.shape[1]
    assert n_pad % tn == 0 and n_pad % tk == 0
    assert tn % 128 == 0 and tk % 128 == 0 and fin_pad % 128 == 0 and fout_pad % 128 == 0

    grid = (n_pad // tn, n_pad // tk)
    kernel = functools.partial(_sage_block_kernel, tk=tk, x_resident=x_resident)

    if x_resident:
        x_spec = pl.BlockSpec((n_pad, fin_pad), lambda i, k: (0, 0))
        x_bytes = n_pad * fin_pad * 2
    else:
        x_spec = pl.BlockSpec((tk, fin_pad), lambda i, k: (k, 0))
        x_bytes = (n_pad // tn) * n_pad * fin_pad * 2

    flops = 2 * n_pad * n_pad * fin_pad + 2 * n_pad * fin_pad * fout_pad
    bytes_accessed = (n_pad * n_pad * 1          # int8 adjacency
                      + x_bytes                  # bf16 features
                      + fin_pad * fout_pad * 2   # folded W_l
                      + n_pad * fout_pad * 4     # self/root term
                      + n_pad * 4                # deg_inv
                      + n_pad * fout_pad * 2)    # bf16 output

    return pl.pallas_call(
        kernel,
        out_shape=jax.ShapeDtypeStruct((n_pad, fout_pad), jnp.bfloat16),
        grid_spec=pltpu.PrefetchScalarGridSpec(
            num_scalar_prefetch=0,
            grid=grid,
            in_specs=[
                pl.BlockSpec((tn, tk), lambda i, k: (i, k)),               # A (int8)
                pl.BlockSpec((tn, 1), lambda i, k: (i, 0)),                # deg_inv
                x_spec,                                                    # X
                pl.BlockSpec((fin_pad, fout_pad), lambda i, k: (0, 0)),    # folded W_l
                pl.BlockSpec((tn, fout_pad), lambda i, k: (i, 0)),         # self term
            ],
            out_specs=pl.BlockSpec((tn, fout_pad), lambda i, k: (i, 0)),
            scratch_shapes=[pltpu.VMEM((tn, fin_pad), jnp.float32)],
        ),
        compiler_params=pltpu.CompilerParams(
            dimension_semantics=("parallel", "arbitrary"),
            vmem_limit_bytes=vmem_limit,
        ),
        cost_estimate=pl.CostEstimate(
            flops=flops, transcendentals=0, bytes_accessed=bytes_accessed),
    )(a_i8, dinv, x_pad, wl_pad, self_proj)


def _fold_bn(params, do_bn):
    """Fold eval-mode BatchNorm + SAGE bias into W_l, W_r, bias (all f32)."""
    wl, wr, bl = params["wl"], params["wr"], params["bl"]
    if do_bn:
        scale = params["gamma"] * jax.lax.rsqrt(params["rv"] + BN_EPS)   # (1, fout)
        return wl * scale, wr * scale, (bl - params["rm"]) * scale + params["beta"]
    return wl, wr, bl


def _pad2(w, r_pad, c_pad):
    r, c = w.shape
    return jnp.zeros((r_pad, c_pad), w.dtype).at[:r, :c].set(w)


def sages_block_forward(x, counts, deg, layer_params, mask=None, do_bn=True):
    """SAGEsBlock.forward: apply each SAGEBlock in sequence, collect per-layer outputs."""
    n, fin = x.shape
    n_pad = _round_up(n, 128)
    fin_pad = _round_up(fin, 128)
    tn, tk = _pick_tiles(n_pad)

    # Un-normalized adjacency counts as int8 (counts are small; clip for safety) and a
    # per-row 1/deg vector in f32. Padded rows/cols of A are zero, so padded nodes never
    # contaminate real rows.
    a_i8 = (jnp.zeros((n_pad, n_pad), jnp.int8)
            .at[:n, :n].set(jnp.clip(counts, 0.0, 127.0).astype(jnp.int8)))
    dinv = (jnp.ones((n_pad, 1), jnp.float32)
            .at[:n, :].set(1.0 / jnp.maximum(deg, 1.0)))
    x_pad = (jnp.zeros((n_pad, fin_pad), jnp.float32)
             .at[:n, :fin].set(x).astype(jnp.bfloat16))

    outs = []
    for params in layer_params:
        fout = params["wl"].shape[1]
        fout_pad = _round_up(fout, 128)
        wl, wr, bias = _fold_bn(params, do_bn)
        wl_pad = _pad2(wl, fin_pad, fout_pad).astype(jnp.bfloat16)
        wr_pad = _pad2(wr, fin_pad, fout_pad).astype(jnp.bfloat16)
        bias_pad = _pad2(bias, 1, fout_pad)
        # Self/root term pre-projected outside the kernel (cheap O(N*F^2) matmul).
        self_proj = jnp.dot(x_pad, wr_pad,
                            preferred_element_type=jnp.float32) + bias_pad

        x_resident, vmem_limit = _plan_layer(n_pad, fin_pad, fout_pad, tn, tk)
        h_pad = sage_block_forward(a_i8, dinv, x_pad, wl_pad, self_proj,
                                   tn=tn, tk=tk, x_resident=x_resident,
                                   vmem_limit=vmem_limit)

        h = h_pad[:n, :fout].astype(jnp.float32)
        outs.append(h[mask] if mask is not None else h)
        # Next layer consumes the lane-dense, already-bf16 padded activation directly.
        x_pad = h_pad
        fin_pad = fout_pad
    return outs


def build_adjacency(edge_index, num_nodes):
    """Dense un-normalized adjacency counts A[i, j] = #edges j -> i, and in-degrees."""
    src, dst = edge_index[0], edge_index[1]
    counts = jnp.zeros((num_nodes, num_nodes), jnp.float32).at[dst, src].add(1.0)
    deg = counts.sum(axis=1, keepdims=True)
    return counts, deg


def init_params(key, dims):
    """Deterministic init (Linear-style uniform); non-trivial BN stats to exercise folding."""
    layers = []
    for i in range(len(dims) - 1):
        fin, fout = dims[i], dims[i + 1]
        key, k1, k2, k3, k4, k5, k6, k7 = jax.random.split(key, 8)
        scale = 1.0 / jnp.sqrt(jnp.float32(fin))
        layers.append(dict(
            wl=jax.random.uniform(k1, (fin, fout), jnp.float32, -scale, scale),
            wr=jax.random.uniform(k2, (fin, fout), jnp.float32, -scale, scale),
            bl=jax.random.uniform(k3, (1, fout), jnp.float32, -scale, scale),
            gamma=1.0 + 0.1 * jax.random.normal(k4, (1, fout), jnp.float32),
            beta=0.1 * jax.random.normal(k5, (1, fout), jnp.float32),
            rm=0.1 * jax.random.normal(k6, (1, fout), jnp.float32),
            rv=1.0 + 0.2 * jax.random.uniform(k7, (1, fout), jnp.float32),
        ))
    return layers


def reference_forward(x, counts, deg, layer_params, do_bn=True):
    """Plain-JAX f32 reference of the eval-mode SAGEsBlock forward."""
    a_mean = counts / jnp.maximum(deg, 1.0)
    outs = []
    h = x
    for p in layer_params:
        agg = a_mean @ h
        z = agg @ p["wl"] + h @ p["wr"] + p["bl"]
        if do_bn:
            z = (z - p["rm"]) * jax.lax.rsqrt(p["rv"] + BN_EPS) * p["gamma"] + p["beta"]
        h = jnp.maximum(z, 0.0)
        outs.append(h)
    return outs


if __name__ == "__main__":
    key = jax.random.PRNGKey(0)

    # Small, module-consistent shapes (multi-tile to exercise the 2-D grid).
    num_nodes = 256
    n_features = 32
    gnns_hidden = [64, 128]           # layer_num = 2
    layer_num = len(gnns_hidden)
    num_edges = 1024

    k_x, k_src, k_dst, k_p = jax.random.split(key, 4)
    x = jax.random.normal(k_x, (num_nodes, n_features), jnp.float32)
    src = jax.random.randint(k_src, (num_edges,), 0, num_nodes)
    dst = jax.random.randint(k_dst, (num_edges,), 0, num_nodes)
    edge_index = jnp.stack([src, dst], axis=0)

    counts, deg = build_adjacency(edge_index, num_nodes)
    params = init_params(k_p, [n_features] + gnns_hidden)

    outs = sages_block_forward(x, counts, deg, params, mask=None, do_bn=True)
    for o in outs:
        jax.block_until_ready(o)

    assert len(outs) == layer_num
    assert outs[0].shape == (num_nodes, gnns_hidden[0])
    assert outs[1].shape == (num_nodes, gnns_hidden[1])

    # Numerical check vs. the f32 reference (bf16 features/weights -> loose tolerance).
    refs = reference_forward(x, counts, deg, params, do_bn=True)
    for o, r in zip(outs, refs):
        err = float(jnp.max(jnp.abs(o - r)))
        tol = 1e-1 * max(1.0, float(jnp.max(jnp.abs(r))))
        assert err < tol, f"max abs err {err} (tol {tol})"

    print("KERNEL_OK")
</pallas_src>

<mosaic_0001>
module attributes {stable_mosaic.version = 11 : i64} {
  func.func @_sage_block_kernel(%arg0: i32, %arg1: i32, %arg2: memref<128x256xi8, #tpu.memory_space<vmem>>, %arg3: memref<128x1xf32, #tpu.memory_space<vmem>>, %arg4: memref<256x128xbf16, #tpu.memory_space<vmem>>, %arg5: memref<128x128xbf16, #tpu.memory_space<vmem>>, %arg6: memref<128x128xf32, #tpu.memory_space<vmem>>, %arg7: memref<128x128xbf16, #tpu.memory_space<vmem>>, %arg8: memref<128x128xf32, #tpu.memory_space<vmem>>) attributes {dimension_semantics = [#tpu.dimension_semantics<parallel>, #tpu.dimension_semantics<arbitrary>], iteration_bounds = array<i64: 2, 1>, scalar_prefetch = 0 : i64, scratch_operands = 1 : i64, tpu.core_type = #tpu.core_type<tc>, window_params = [{transform_indices = @transform_0, window_bounds = array<i64: 128, 256>}, {transform_indices = @transform_1, window_bounds = array<i64: 128, 1>}, {pipeline_mode = #tpu.pipeline_mode<synchronous>, transform_indices = @transform_2, window_bounds = array<i64: 256, 128>}, {pipeline_mode = #tpu.pipeline_mode<synchronous>, transform_indices = @transform_3, window_bounds = array<i64: 128, 128>}, {transform_indices = @transform_4, window_bounds = array<i64: 128, 128>}, {transform_indices = @transform_5, window_bounds = array<i64: 128, 128>}]} {
    %c0_i32 = arith.constant 0 : i32
    %0 = arith.cmpi eq, %arg1, %c0_i32 : i32
    %1 = arith.extui %0 : i1 to i32
    %c0_i32_0 = arith.constant 0 : i32
    %2 = arith.cmpi ne, %1, %c0_i32_0 : i32
    scf.if %2 {
      %cst_9 = arith.constant 0.000000e+00 : f32
      %17 = vector.broadcast %cst_9 : f32 to vector<128x128xf32>
      %c0_10 = arith.constant 0 : index
      %c0_11 = arith.constant 0 : index
      %18 = vector.load %arg8[%c0_10, %c0_11] : memref<128x128xf32, #tpu.memory_space<vmem>>, vector<128x128xf32>
      tpu.vector_store %arg8[%c0_10, %c0_11], %17 {strides = array<i32>} : memref<128x128xf32, #tpu.memory_space<vmem>>, vector<128x128xf32>,
    } else {
    }
    %c0 = arith.constant 0 : index
    %c0_1 = arith.constant 0 : index
    %3 = vector.load %arg2[%c0, %c0_1] : memref<128x256xi8, #tpu.memory_space<vmem>>, vector<128x256xi8>
    %4 = arith.sitofp %3 : vector<128x256xi8> to vector<128x256xf32>
    %5 = arith.truncf %4 : vector<128x256xf32> to vector<128x256xbf16>
    %c256_i32 = arith.constant 256 : i32
    %6 = arith.muli %arg1, %c256_i32 : i32
    %7 = tpu.assume_multiple %6, 256 : i32
    %8 = arith.index_cast %7 : i32 to index
    %c0_2 = arith.constant 0 : index
    %9 = vector.load %arg4[%8, %c0_2] : memref<256x128xbf16, #tpu.memory_space<vmem>>, vector<256x128xbf16>
    %c0_3 = arith.constant 0 : index
    %c0_4 = arith.constant 0 : index
    %10 = vector.load %arg8[%c0_3, %c0_4] : memref<128x128xf32, #tpu.memory_space<vmem>>, vector<128x128xf32>
    %cst = arith.constant dense<0.000000e+00> : vector<128x128xf32>
    %11 = tpu.matmul %5, %9, %cst {dimension_numbers = #tpu.dot_dimension_numbers<[1], [0], [0], [1], [0, 0, 1, 1], [], []>} : vector<128x256xbf16>, vector<256x128xbf16>, vector<128x128xf32> -> vector<128x128xf32>
    %12 = arith.addf %10, %11 : vector<128x128xf32>
    %c0_5 = arith.constant 0 : index
    %c0_6 = arith.constant 0 : index
    %13 = vector.load %arg8[%c0_5, %c0_6] : memref<128x128xf32, #tpu.memory_space<vmem>>, vector<128x128xf32>
    tpu.vector_store %arg8[%c0_5, %c0_6], %12 {strides = array<i32>} : memref<128x128xf32, #tpu.memory_space<vmem>>, vector<128x128xf32>,
    %c0_i32_7 = arith.constant 0 : i32
    %14 = arith.cmpi eq, %arg1, %c0_i32_7 : i32
    %15 = arith.extui %14 : i1 to i32
    %c0_i32_8 = arith.constant 0 : i32
    %16 = arith.cmpi ne, %15, %c0_i32_8 : i32
    scf.if %16 {
      %c0_9 = arith.constant 0 : index
      %c0_10 = arith.constant 0 : index
      %17 = vector.load %arg8[%c0_9, %c0_10] : memref<128x128xf32, #tpu.memory_space<vmem>>, vector<128x128xf32>
      %c0_11 = arith.constant 0 : index
      %c0_12 = arith.constant 0 : index
      %18 = vector.load %arg3[%c0_11, %c0_12] : memref<128x1xf32, #tpu.memory_space<vmem>>, vector<128x1xf32>
      %19 = vector.broadcast %18 : vector<128x1xf32> to vector<128x128xf32>
      %20 = arith.mulf %17, %19 : vector<128x128xf32>
      %21 = arith.truncf %20 : vector<128x128xf32> to vector<128x128xbf16>
      %c0_13 = arith.constant 0 : index
      %c0_14 = arith.constant 0 : index
      %22 = vector.load %arg5[%c0_13, %c0_14] : memref<128x128xbf16, #tpu.memory_space<vmem>>, vector<128x128xbf16>
      %cst_15 = arith.constant dense<0.000000e+00> : vector<128x128xf32>
      %23 = tpu.matmul %21, %22, %cst_15 {dimension_numbers = #tpu.dot_dimension_numbers<[1], [0], [0], [1], [0, 0, 1, 1], [], []>} : vector<128x128xbf16>, vector<128x128xbf16>, vector<128x128xf32> -> vector<128x128xf32>
      %c0_16 = arith.constant 0 : index
      %c0_17 = arith.constant 0 : index
      %24 = vector.load %arg6[%c0_16, %c0_17] : memref<128x128xf32, #tpu.memory_space<vmem>>, vector<128x128xf32>
      %25 = arith.addf %23, %24 : vector<128x128xf32>
      %cst_18 = arith.constant 0.000000e+00 : f32
      %26 = vector.broadcast %cst_18 : f32 to vector<128x128xf32>
      %27 = arith.maximumf %25, %26 : vector<128x128xf32>
      %28 = arith.truncf %27 : vector<128x128xf32> to vector<128x128xbf16>
      %c0_19 = arith.constant 0 : index
      %c0_20 = arith.constant 0 : index
      %29 = vector.load %arg7[%c0_19, %c0_20] : memref<128x128xbf16, #tpu.memory_space<vmem>>, vector<128x128xbf16>
      tpu.vector_store %arg7[%c0_19, %c0_20], %28 {strides = array<i32>} : memref<128x128xbf16, #tpu.memory_space<vmem>>, vector<128x128xbf16>,
    } else {
    }
    return
  }
  func.func @transform_0(%arg0: i32, %arg1: i32) -> (i32, i32) {
    %c0_i32 = arith.constant 0 : i32
    return %arg0, %arg1 : i32, i32
  }
  func.func @transform_1(%arg0: i32, %arg1: i32) -> (i32, i32) {
    %c0_i32 = arith.constant 0 : i32
    %c0_i32_0 = arith.constant 0 : i32
    return %arg0, %c0_i32 : i32, i32
  }
  func.func @transform_2(%arg0: i32, %arg1: i32) -> (i32, i32) {
    %c0_i32 = arith.constant 0 : i32
    %c0_i32_0 = arith.constant 0 : i32
    %c0_i32_1 = arith.constant 0 : i32
    return %c0_i32, %c0_i32_0 : i32, i32
  }
  func.func @transform_3(%arg0: i32, %arg1: i32) -> (i32, i32) {
    %c0_i32 = arith.constant 0 : i32
    %c0_i32_0 = arith.constant 0 : i32
    %c0_i32_1 = arith.constant 0 : i32
    return %c0_i32, %c0_i32_0 : i32, i32
  }
  func.func @transform_4(%arg0: i32, %arg1: i32) -> (i32, i32) {
    %c0_i32 = arith.constant 0 : i32
    %c0_i32_0 = arith.constant 0 : i32
    return %arg0, %c0_i32 : i32, i32
  }
  func.func @transform_5(%arg0: i32, %arg1: i32) -> (i32, i32) {
    %c0_i32 = arith.constant 0 : i32
    %c0_i32_0 = arith.constant 0 : i32
    return %arg0, %c0_i32 : i32, i32
  }
}

</mosaic_0001>

<llo_original>
// kernel: tpu_custom_call.1
$region0: #{tpu_custom_call.1}
  #allocation0 [shape = 'u32[]', space=smem, size = 0x4, offset = 0x4, fixed_abs, tag = 'smem constant byte address 0x4 - core index']
  #allocation1 [shape = 'u32[144,128]{1,0:T(1,128)}', space=vmem, size = 0x12000, scoped, tag = 'internal scratch']
  #allocation2 [shape = 'f32[128,128]{1,0:T(8,128)}', space=vmem, size = 0x10000, scoped, tag = 'scratch operand']
  %s0 = inlined_call_operand.hbm [shape: s8[256,256], index: 0, kind: input, shape index: {}]
  %s1 = inlined_call_operand.vmem [shape: f32[256,1], index: 1, kind: input, shape index: {}]
  %s2 = inlined_call_operand.hbm [shape: bf16[256,128], index: 2, kind: input, shape index: {}]
  %s3 = inlined_call_operand.hbm [shape: bf16[128,128], index: 3, kind: input, shape index: {}]
  %s4 = inlined_call_operand.vmem [shape: f32[256,128], index: 4, kind: input, shape index: {}]
  %s5 = inlined_call_operand.hbm [shape: bf16[256,128], index: 5, kind: output, shape index: {}]
  %s6 = sld [smem:[#allocation0]]
  $region73: #{tpu_custom_call.1} parent=0
    _
  %s8 = ssub.s32 1, %s6
  %s9 = scalar_select 0, %s8, %s6
  $region1: #{tpu_custom_call.1} parent=0
    #allocation3 [shape = 'u8[65536]{0}', space=vmem, size = 0x10000, scoped, tag = 'input window, operand 0']
    #allocation4 [shape = 's32[2]{0}', space=sflag, size = 0x8, scoped, tag = 'scoped memory for tpu_custom_call.1']
    #allocation5 [shape = 's32[2]{0}', space=sflag, size = 0x8, scoped, tag = 'scoped memory for tpu_custom_call.1']
    #allocation6 [shape = 'u8[65536]{0}', space=vmem, size = 0x10000, scoped, tag = 'input window, operand 2, single buffered']
    #allocation7 [shape = 's32[1]{0}', space=sflag, size = 0x4, scoped, tag = 'scoped memory for tpu_custom_call.1']
    #allocation8 [shape = 'u8[32768]{0}', space=vmem, size = 0x8000, scoped, tag = 'input window, operand 3, single buffered']
    #allocation9 [shape = 'u8[65536]{0}', space=vmem, size = 0x10000, scoped, tag = 'output window, operand 0']
    %10 = vsyncpa [#allocation4], 0
    %s11 = scalar_lea.sflag [#allocation4], 1
    %12 = vsyncpa %s11, 0
    %13 = vsyncpa [#allocation7], 0
    %14 = vsyncpa [#allocation5], 0
    %s15 = scalar_lea.sflag [#allocation5], 1
    %16 = vsyncpa %s15, 0
    loop: start=0, step=1, limit=4
    $region2: #{tpu_custom_call.1} parent=1 // loop_pre_header
      _
    $region3: #{tpu_custom_call.1} parent=1 // loop_header
      %s18 = sphi 0, %s22
      %p19 = scmp.ge.s32.totalorder %s18, 4
      %s25 = sphi 0, %s37
      %s26 = sphi 0, %s33
      %s27 = sphi 0, %s25
      %s28 = sphi 0, %s26
      %s29 = sphi 0, %s27
      %s30 = sphi 0, %s28
      %s42 = sphi 0, %s44
      %s45 = sphi 0, %s42
      %s46 = sphi 0, %s45
      %s62 = sphi 0, %s46
      %s68 = sphi 0, %s70
      %s71 = sphi 0, %s68
      %s72 = sphi 0, %s71
      %s88 = sphi 0, %s72
      %s92 = sphi 0, %s92
      %s94 = sphi 0, %s92
      %s95 = sphi 0, %s94
      %s109 = sphi 0, %s95
      %s113 = sphi 0, %s113
      %s115 = sphi 0, %s113
      %s116 = sphi 0, %s115
      %s130 = sphi 0, %s116
      %s136 = sphi 0, %s138
      %s139 = sphi 0, %s136
      %s140 = sphi 0, %s139
      %s156 = sphi 0, %s140
      %s162 = sphi 0, %s164
      %s165 = sphi 0, %s162
      %s166 = sphi 0, %s165
      %s182 = sphi 0, %s166
    $region4: #{tpu_custom_call.1} parent=1 // loop_header_branch
      %21 = sbr.rel (%p19) target = $region8
    $region5: #{tpu_custom_call.1} parent=1 // loop_body
      %s23 = ssub.s32 %s18, 1
      %s24 = ssub.s32 %s18, 2
      %s31 = sadd.s32 1, %s26
      %p32 = scmp.ge.s32.totalorder %s31, 1
      %s33 = scalar_select %p32, 0, %s31
      %s34 = sadd.s32 1, %s25
      %s35 = scalar_select %p32, %s34, %s25
      %p36 = scmp.ge.s32.totalorder %s35, 2
      %s37 = scalar_select %p36, 0, %s35
      %s38 = ssub.s32 %s25, %s37
      %s39 = ssub.s32 %s26, %s33
      %s40 = sor.u32 %s38, %s39
      %p41 = scmp.eq.s32.totalorder %s40, 0
      %s43 = sadd.s32 %s42, 1
      %s44 = scalar_select %p41, %s42, %s43
      %p47 = pneg %p41
      %p48 = scmp.eq.s32.totalorder %s18, 1
      %p49 = por %p47, %p48
      %p50 = scmp.ne.s32.totalorder %s42, %s45
      %p51 = scmp.eq.s32.totalorder %s18, 0
      %p52 = por %p50, %p51
      %p53 = scmp.ne.s32.totalorder %s42, %s45
      %p54 = scmp.eq.s32.totalorder %s23, 1
      %p55 = por %p53, %p54
      %p56 = scmp.ne.s32.totalorder %s45, %s46
      %p57 = scmp.eq.s32.totalorder %s23, 0
      %p58 = por %p56, %p57
      %p59 = scmp.ne.s32.totalorder %s45, %s46
      %p60 = scmp.eq.s32.totalorder %s24, 1
      %p61 = por %p59, %p60
      %p63 = scmp.ne.s32.totalorder %s46, %s62
      %p64 = scmp.eq.s32.totalorder %s24, 0
      %p65 = por %p63, %p64
      %s66 = ssub.s32 %s25, %s37
      %p67 = scmp.eq.s32.totalorder %s66, 0
      %s69 = sadd.s32 %s68, 1
      %s70 = scalar_select %p67, %s68, %s69
      %p73 = pneg %p67
      %p74 = scmp.eq.s32.totalorder %s18, 1
      %p75 = por %p73, %p74
      %p76 = scmp.ne.s32.totalorder %s68, %s71
      %p77 = scmp.eq.s32.totalorder %s18, 0
      %p78 = por %p76, %p77
      %p79 = scmp.ne.s32.totalorder %s68, %s71
      %p80 = scmp.eq.s32.totalorder %s23, 1
      %p81 = por %p79, %p80
      %p82 = scmp.ne.s32.totalorder %s71, %s72
      %p83 = scmp.eq.s32.totalorder %s23, 0
      %p84 = por %p82, %p83
      %p85 = scmp.ne.s32.totalorder %s71, %s72
      %p86 = scmp.eq.s32.totalorder %s24, 1
      %p87 = por %p85, %p86
      %p89 = scmp.ne.s32.totalorder %s72, %s88
      %p90 = scmp.eq.s32.totalorder %s24, 0
      %p91 = por %p89, %p90
      %s93 = sadd.s32 %s92, 1
      %p96 = scmp.eq.s32.totalorder %s18, 1
      %p97 = scmp.ne.s32.totalorder %s92, %s94
      %p98 = scmp.eq.s32.totalorder %s18, 0
      %p99 = por %p97, %p98
      %p100 = scmp.ne.s32.totalorder %s92, %s94
      %p101 = scmp.eq.s32.totalorder %s23, 1
      %p102 = por %p100, %p101
      %p103 = scmp.ne.s32.totalorder %s94, %s95
      %p104 = scmp.eq.s32.totalorder %s23, 0
      %p105 = por %p103, %p104
      %p106 = scmp.ne.s32.totalorder %s94, %s95
      %p107 = scmp.eq.s32.totalorder %s24, 1
      %p108 = por %p106, %p107
      %p110 = scmp.ne.s32.totalorder %s95, %s109
      %p111 = scmp.eq.s32.totalorder %s24, 0
      %p112 = por %p110, %p111
      %s114 = sadd.s32 %s113, 1
      %p117 = scmp.eq.s32.totalorder %s18, 1
      %p118 = scmp.ne.s32.totalorder %s113, %s115
      %p119 = scmp.eq.s32.totalorder %s18, 0
      %p120 = por %p118, %p119
      %p121 = scmp.ne.s32.totalorder %s113, %s115
      %p122 = scmp.eq.s32.totalorder %s23, 1
      %p123 = por %p121, %p122
      %p124 = scmp.ne.s32.totalorder %s115, %s116
      %p125 = scmp.eq.s32.totalorder %s23, 0
      %p126 = por %p124, %p125
      %p127 = scmp.ne.s32.totalorder %s115, %s116
      %p128 = scmp.eq.s32.totalorder %s24, 1
      %p129 = por %p127, %p128
      %p131 = scmp.ne.s32.totalorder %s116, %s130
      %p132 = scmp.eq.s32.totalorder %s24, 0
      %p133 = por %p131, %p132
      %s134 = ssub.s32 %s25, %s37
      %p135 = scmp.eq.s32.totalorder %s134, 0
      %s137 = sadd.s32 %s136, 1
      %s138 = scalar_select %p135, %s136, %s137
      %p141 = pneg %p135
      %p142 = scmp.eq.s32.totalorder %s18, 1
      %p143 = por %p141, %p142
      %p144 = scmp.ne.s32.totalorder %s136, %s139
      %p145 = scmp.eq.s32.totalorder %s18, 0
      %p146 = por %p144, %p145
      %p147 = scmp.ne.s32.totalorder %s136, %s139
      %p148 = scmp.eq.s32.totalorder %s23, 1
      %p149 = por %p147, %p148
      %p150 = scmp.ne.s32.totalorder %s139, %s140
      %p151 = scmp.eq.s32.totalorder %s23, 0
      %p152 = por %p150, %p151
      %p153 = scmp.ne.s32.totalorder %s139, %s140
      %p154 = scmp.eq.s32.totalorder %s24, 1
      %p155 = por %p153, %p154
      %p157 = scmp.ne.s32.totalorder %s140, %s156
      %p158 = scmp.eq.s32.totalorder %s24, 0
      %p159 = por %p157, %p158
      %s160 = ssub.s32 %s25, %s37
      %p161 = scmp.eq.s32.totalorder %s160, 0
      %s163 = sadd.s32 %s162, 1
      %s164 = scalar_select %p161, %s162, %s163
      %p167 = pneg %p161
      %p168 = scmp.eq.s32.totalorder %s18, 1
      %p169 = por %p167, %p168
      %p170 = scmp.ne.s32.totalorder %s162, %s165
      %p171 = scmp.eq.s32.totalorder %s18, 0
      %p172 = por %p170, %p171
      %p173 = scmp.ne.s32.totalorder %s162, %s165
      %p174 = scmp.eq.s32.totalorder %s23, 1
      %p175 = por %p173, %p174
      %p176 = scmp.ne.s32.totalorder %s165, %s166
      %p177 = scmp.eq.s32.totalorder %s23, 0
      %p178 = por %p176, %p177
      %p179 = scmp.ne.s32.totalorder %s165, %s166
      %p180 = scmp.eq.s32.totalorder %s24, 1
      %p181 = por %p179, %p180
      %p183 = scmp.ne.s32.totalorder %s166, %s182
      %p184 = scmp.eq.s32.totalorder %s24, 0
      %p185 = por %p183, %p184
      %p186 = scmp.le.s32.totalorder 1, %s18
      %p187 = scmp.lt.s32.totalorder %s18, 3
      %p188 = pnand %p186, %p187
      %p189 = pneg %p188
      // Predicated region
      $region9: #{tpu_custom_call.1} parent=5 // pred_check
        _
      $region10: #{tpu_custom_call.1} parent=5 // pred_check_branch
        %191 = sbr.rel (%p188) target = $region12
      $region11: #{tpu_custom_call.1} parent=5 // pred_region
        %s192 = ssub.s32 %s18, 1
        // Predicated region
        $region13: #{tpu_custom_call.1} parent=11 // pred_check
          %p193 = pneg %p105
        $region14: #{tpu_custom_call.1} parent=11 // pred_check_branch
          %195 = sbr.rel (%p193) target = $region16
        $region15: #{tpu_custom_call.1} parent=11 // pred_region
          %s197 = ssub.s32 2048, 2048
          %198 = vsyncadd [#allocation7], %s197
          %s199 = sshll.u32 [#allocation6], 4
          %s200 = int_to_ptr.vmem [resolvable:$true] %s199
          %205 = dma.hbm_to_vmem [thread:$0]  %s2, 2048, %s200, [#allocation7], 64, 64, 4
        $region16: #{tpu_custom_call.1} parent=11 // pred_fallthru
          _
        // Predicated region
        $region17: #{tpu_custom_call.1} parent=11 // pred_check
          %p206 = pneg %p126
        $region18: #{tpu_custom_call.1} parent=11 // pred_check_branch
          %208 = sbr.rel (%p206) target = $region20
        $region19: #{tpu_custom_call.1} parent=11 // pred_region
          %s210 = ssub.s32 1024, 1024
          %211 = vsyncadd [#allocation7], %s210
          %s212 = sshll.u32 [#allocation8], 4
          %s213 = int_to_ptr.vmem [resolvable:$true] %s212
          %218 = dma.hbm_to_vmem [thread:$0]  %s3, 1024, %s213, [#allocation7], 64, 64, 4
        $region20: #{tpu_custom_call.1} parent=11 // pred_fallthru
          _
      $region12: #{tpu_custom_call.1} parent=5 // pred_fallthru
        _
      %p219 = scmp.lt.s32.totalorder %s18, 2
      // Predicated region
      $region21: #{tpu_custom_call.1} parent=5 // pred_check
        %p220 = pneg %p219
      $region22: #{tpu_custom_call.1} parent=5 // pred_check_branch
        %222 = sbr.rel (%p220) target = $region24
      $region23: #{tpu_custom_call.1} parent=5 // pred_region
        // Predicated region
        $region25: #{tpu_custom_call.1} parent=23 // pred_check
          %p223 = pneg %p52
        $region26: #{tpu_custom_call.1} parent=23 // pred_check_branch
          %225 = sbr.rel (%p223) target = $region28
        $region27: #{tpu_custom_call.1} parent=23 // pred_region
          %s226 = sand.u32 %s42, 1
          %s227 = scalar_lea.sflag [#allocation4], %s226
          %s228 = sand.u32 %s42, 1
          %s229 = smul.addr %s228, 64
          %s230 = scalar_lea.vmem [#allocation3], %s229
          %s231 = smul.u32 4, %s25
          %s232 = smul.u32 2, %s26
          %s234 = ssub.s32 1024, 1024
          %235 = vsyncadd %s227, %s234
          %s236 = smul.addr %s231, 2
          %s237 = sadd.s32 %s232, %s236
          %s238 = smul.addr %s237, 128
          %s239 = scalar_lea.hbm %s0, %s238
          %s240 = sshll.u32 %s230, 4
          %s241 = int_to_ptr.vmem [resolvable:$true] %s240
          %246 = dma.hbm_to_vmem [thread:$0]  %s239, 1024, %s241, %s227, 256, 256, 16
        $region28: #{tpu_custom_call.1} parent=23 // pred_fallthru
          _
        // Predicated region
        $region29: #{tpu_custom_call.1} parent=23 // pred_check
          %p247 = pneg %p78
        $region30: #{tpu_custom_call.1} parent=23 // pred_check_branch
          %249 = sbr.rel (%p247) target = $region32
        $region31: #{tpu_custom_call.1} parent=23 // pred_region
          %s250 = smul.u32 16, %s25
          %p251 = scmp.lt.s32.totalorder %s250, 31
          %s252 = scalar_select %p251, %s250, 31
          %s253 = smul.addr %s252, 8
          %s254 = scalar_lea.vmem %s1, %s253
          %s255 = smul.u32 16, %s25
        $region32: #{tpu_custom_call.1} parent=23 // pred_fallthru
          _
        // Predicated region
        $region33: #{tpu_custom_call.1} parent=23 // pred_check
          %p256 = pneg %p146
        $region34: #{tpu_custom_call.1} parent=23 // pred_check_branch
          %258 = sbr.rel (%p256) target = $region36
        $region35: #{tpu_custom_call.1} parent=23 // pred_region
          %s259 = smul.u32 16, %s25
          %p260 = scmp.lt.s32.totalorder %s259, 31
          %s261 = scalar_select %p260, %s259, 31
          %s262 = smul.addr %s261, 8
          %s263 = scalar_lea.vmem %s4, %s262
          %s264 = smul.u32 16, %s25
        $region36: #{tpu_custom_call.1} parent=23 // pred_fallthru
          _
      $region24: #{tpu_custom_call.1} parent=5 // pred_fallthru
        _
      %p265 = scmp.le.s32.totalorder 1, %s18
      %p266 = scmp.lt.s32.totalorder %s18, 3
      %p267 = pnand %p265, %p266
      %p268 = pneg %p267
      // Predicated region
      $region37: #{tpu_custom_call.1} parent=5 // pred_check
        _
      $region38: #{tpu_custom_call.1} parent=5 // pred_check_branch
        %270 = sbr.rel (%p267) target = $region40
      $region39: #{tpu_custom_call.1} parent=5 // pred_region
        %s271 = ssub.s32 %s18, 1
        %s272 = sand.u32 %s45, 1
        %s273 = scalar_lea.sflag [#allocation4], %s272
        %s274 = sand.u32 %s45, 1
        %s275 = smul.addr %s274, 64
        %s276 = scalar_lea.vmem [#allocation3], %s275
        // Predicated region
        $region41: #{tpu_custom_call.1} parent=39 // pred_check
          %p277 = pneg %p58
        $region42: #{tpu_custom_call.1} parent=39 // pred_check_branch
          %279 = sbr.rel (%p277) target = $region44
        $region43: #{tpu_custom_call.1} parent=39 // pred_region
          %280 = dma.done %s273, 1024
        $region44: #{tpu_custom_call.1} parent=39 // pred_fallthru
          _
        // Predicated region
        $region45: #{tpu_custom_call.1} parent=39 // pred_check
          %p281 = pneg %p105
        $region46: #{tpu_custom_call.1} parent=39 // pred_check_branch
          %283 = sbr.rel (%p281) target = $region48
        $region47: #{tpu_custom_call.1} parent=39 // pred_region
          %284 = dma.done [#allocation7], 2048
        $region48: #{tpu_custom_call.1} parent=39 // pred_fallthru
          _
        // Predicated region
        $region49: #{tpu_custom_call.1} parent=39 // pred_check
          %p285 = pneg %p126
        $region50: #{tpu_custom_call.1} parent=39 // pred_check_branch
          %287 = sbr.rel (%p285) target = $region52
        $region51: #{tpu_custom_call.1} parent=39 // pred_region
          %288 = dma.done [#allocation7], 1024
        $region52: #{tpu_custom_call.1} parent=39 // pred_fallthru
          _
        %s289 = sand.u32 %s45, 1
        %s290 = scalar_lea.sflag [#allocation4], %s289
        %s291 = sand.u32 %s45, 1
        %s292 = smul.addr %s291, 64
        %s293 = scalar_lea.vmem [#allocation3], %s292
        %p294 = pneg %p58
        %p295 = pneg %p55
        %s296 = smul.u32 16, %s27
        %p297 = scmp.lt.s32.totalorder %s296, 31
        %s298 = scalar_select %p297, %s296, 31
        %s299 = smul.addr %s298, 8
        %s300 = scalar_lea.vmem %s1, %s299
        %p301 = pneg %p84
        %p302 = pneg %p81
        %p303 = pneg %p105
        %p304 = pneg %p102
        %p305 = pneg %p126
        %p306 = pneg %p123
        %s307 = smul.u32 16, %s27
        %p308 = scmp.lt.s32.totalorder %s307, 31
        %s309 = scalar_select %p308, %s307, 31
        %s310 = smul.addr %s309, 8
        %s311 = scalar_lea.vmem %s4, %s310
        %p312 = pneg %p152
        %p313 = pneg %p149
        %p314 = pneg %p178
        %p315 = pneg %p175
        %s316 = sand.u32 %s165, 1
        %s317 = scalar_lea.sflag [#allocation5], %s316
        %s318 = sand.u32 %s165, 1
        %s319 = smul.addr %s318, 64
        %s320 = scalar_lea.vmem [#allocation9], %s319
        %s321 = smul.u32 4, %s27
        %s322 = smul.u32 2, %s28
        %s323 = smul.u32 16, %s27
        %p324 = scmp.lt.s32.totalorder %s323, 31
        %s325 = scalar_select %p324, %s323, 31
        %s326 = smul.addr %s325, 8
        %s327 = scalar_lea.vmem %s1, %s326
        %s328 = smul.u32 16, %s27
        %s329 = smul.u32 16, %s27
        %p330 = scmp.lt.s32.totalorder %s329, 31
        %s331 = scalar_select %p330, %s329, 31
        %s332 = smul.addr %s331, 8
        %s333 = scalar_lea.vmem %s4, %s332
        %s334 = smul.u32 16, %s27
        %s335 = smul.u32 16, %s27
        %p337 = scmp.eq.s32.totalorder %s28, 0
        // Predicated region
        $region53: #{tpu_custom_call.1} parent=39 // pred_check
          %p338 = pneg %p337
        $region54: #{tpu_custom_call.1} parent=39 // pred_check_branch
          %340 = sbr.rel (%p338) target = $region56
        $region55: #{tpu_custom_call.1} parent=39 // pred_region
          %341 = vst [vmem:[#allocation2] sm:$0xff] 0.0
          %342 = vst [vmem:[#allocation2 + $0x8] sm:$0xff] 0.0
          %343 = vst [vmem:[#allocation2 + $0x10] sm:$0xff] 0.0
          %344 = vst [vmem:[#allocation2 + $0x18] sm:$0xff] 0.0
          %345 = vst [vmem:[#allocation2 + $0x20] sm:$0xff] 0.0
          %346 = vst [vmem:[#allocation2 + $0x28] sm:$0xff] 0.0
          %347 = vst [vmem:[#allocation2 + $0x30] sm:$0xff] 0.0
          %348 = vst [vmem:[#allocation2 + $0x38] sm:$0xff] 0.0
          %349 = vst [vmem:[#allocation2 + $0x40] sm:$0xff] 0.0
          %350 = vst [vmem:[#allocation2 + $0x48] sm:$0xff] 0.0
          %351 = vst [vmem:[#allocation2 + $0x50] sm:$0xff] 0.0
          %352 = vst [vmem:[#allocation2 + $0x58] sm:$0xff] 0.0
          %353 = vst [vmem:[#allocation2 + $0x60] sm:$0xff] 0.0
          %354 = vst [vmem:[#allocation2 + $0x68] sm:$0xff] 0.0
          %355 = vst [vmem:[#allocation2 + $0x70] sm:$0xff] 0.0
          %356 = vst [vmem:[#allocation2 + $0x78] sm:$0xff] 0.0
        $region56: #{tpu_custom_call.1} parent=39 // pred_fallthru
          _
        %v357 = vld [vmem:[%s276] sm:$0xff]
        %v358 = vld [vmem:[%s276 + $0x8] sm:$0xff]
        %v359 = vld [vmem:[%s276 + $0x10] sm:$0xff]
        %v360 = vld [vmem:[%s276 + $0x18] sm:$0xff]
        %v361 = vld [vmem:[%s276 + $0x20] sm:$0xff]
        %v362 = vld [vmem:[%s276 + $0x28] sm:$0xff]
        %v363 = vld [vmem:[%s276 + $0x30] sm:$0xff]
        %v364 = vld [vmem:[%s276 + $0x38] sm:$0xff]
        %v365 = vunpack.c.l.s8.bf16 %v357
        %v366 = vunpack.c.l.s8.bf16 %v358
        %v367 = vunpack.c.h.s8.bf16 %v357
        %v368 = vunpack.c.h.s8.bf16 %v358
        %v369 = vunpack.c.l.s8.bf16 %v359
        %v370 = vunpack.c.l.s8.bf16 %v360
        %v371 = vunpack.c.h.s8.bf16 %v359
        %v372 = vunpack.c.h.s8.bf16 %v360
        %v373 = vunpack.c.l.s8.bf16 %v361
        %v374 = vunpack.c.l.s8.bf16 %v362
        %v375 = vunpack.c.h.s8.bf16 %v361
        %v376 = vunpack.c.h.s8.bf16 %v362
        %v377 = vunpack.c.l.s8.bf16 %v363
        %v378 = vunpack.c.l.s8.bf16 %v364
        %v379 = vunpack.c.h.s8.bf16 %v363
        %v380 = vunpack.c.h.s8.bf16 %v364
        %s381 = smul.u32 %s28, 256
        %s382 = sshra.s32 %s381, 3
        %s383 = sand.u32 %s381, 7
        %s384 = smul.addr %s382, 4
        %s385 = scalar_lea.vmem [#allocation6], %s384
        %v386 = vld [vmem:[%s385] sm:$0xf]
        %v387 = vld [vmem:[%s385 + $0x4] sm:$0xf]
        %v388 = vld [vmem:[%s385 + $0x8] sm:$0xf]
        %v389 = vld [vmem:[%s385 + $0xc] sm:$0xf]
        %v390 = vld [vmem:[%s385 + $0x10] sm:$0xf]
        %v391 = vld [vmem:[%s385 + $0x14] sm:$0xf]
        %v392 = vld [vmem:[%s385 + $0x18] sm:$0xf]
        %v393 = vld [vmem:[%s385 + $0x1c] sm:$0xf]
        %v394 = vld [vmem:[%s385 + $0x20] sm:$0xf]
        %v395 = vld [vmem:[%s385 + $0x24] sm:$0xf]
        %v396 = vld [vmem:[%s385 + $0x28] sm:$0xf]
        %v397 = vld [vmem:[%s385 + $0x2c] sm:$0xf]
        %v398 = vld [vmem:[%s385 + $0x30] sm:$0xf]
        %v399 = vld [vmem:[%s385 + $0x34] sm:$0xf]
        %v400 = vld [vmem:[%s385 + $0x38] sm:$0xf]
        %v401 = vld [vmem:[%s385 + $0x3c] sm:$0xf]
        %v402 = vld [vmem:[%s385 + $0x40] sm:$0xf]
        %v403 = vld [vmem:[%s385 + $0x44] sm:$0xf]
        %v404 = vld [vmem:[%s385 + $0x48] sm:$0xf]
        %v405 = vld [vmem:[%s385 + $0x4c] sm:$0xf]
        %v406 = vld [vmem:[%s385 + $0x50] sm:$0xf]
        %v407 = vld [vmem:[%s385 + $0x54] sm:$0xf]
        %v408 = vld [vmem:[%s385 + $0x58] sm:$0xf]
        %v409 = vld [vmem:[%s385 + $0x5c] sm:$0xf]
        %v410 = vld [vmem:[%s385 + $0x60] sm:$0xf]
        %v411 = vld [vmem:[%s385 + $0x64] sm:$0xf]
        %v412 = vld [vmem:[%s385 + $0x68] sm:$0xf]
        %v413 = vld [vmem:[%s385 + $0x6c] sm:$0xf]
        %v414 = vld [vmem:[%s385 + $0x70] sm:$0xf]
        %v415 = vld [vmem:[%s385 + $0x74] sm:$0xf]
        %v416 = vld [vmem:[%s385 + $0x78] sm:$0xf]
        %v417 = vld [vmem:[%s385 + $0x7c] sm:$0xf]
        %v418 = vld [vmem:[#allocation2] sm:$0xff]
        %v419 = vld [vmem:[#allocation2 + $0x8] sm:$0xff]
        %v420 = vld [vmem:[#allocation2 + $0x10] sm:$0xff]
        %v421 = vld [vmem:[#allocation2 + $0x18] sm:$0xff]
        %v422 = vld [vmem:[#allocation2 + $0x20] sm:$0xff]
        %v423 = vld [vmem:[#allocation2 + $0x28] sm:$0xff]
        %v424 = vld [vmem:[#allocation2 + $0x30] sm:$0xff]
        %v425 = vld [vmem:[#allocation2 + $0x38] sm:$0xff]
        %v426 = vld [vmem:[#allocation2 + $0x40] sm:$0xff]
        %v427 = vld [vmem:[#allocation2 + $0x48] sm:$0xff]
        %v428 = vld [vmem:[#allocation2 + $0x50] sm:$0xff]
        %v429 = vld [vmem:[#allocation2 + $0x58] sm:$0xff]
        %v430 = vld [vmem:[#allocation2 + $0x60] sm:$0xff]
        %v431 = vld [vmem:[#allocation2 + $0x68] sm:$0xff]
        %v432 = vld [vmem:[#allocation2 + $0x70] sm:$0xff]
        %v433 = vld [vmem:[#allocation2 + $0x78] sm:$0xff]
        %v466 = vunpack.c.l.b16 %v386
        %v467 = vunpack.c.l.b16 %v387
        %v468 = vunpack.c.l.b16 %v388
        %v469 = vunpack.c.l.b16 %v389
        %v470 = vunpack.c.l.b16 %v390
        %v471 = vunpack.c.l.b16 %v391
        %v472 = vunpack.c.l.b16 %v392
        %v473 = vunpack.c.l.b16 %v393
        %v474 = vunpack.c.l.b16 %v394
        %v475 = vunpack.c.l.b16 %v395
        %v476 = vunpack.c.l.b16 %v396
        %v477 = vunpack.c.l.b16 %v397
        %v478 = vunpack.c.l.b16 %v398
        %v479 = vunpack.c.l.b16 %v399
        %v480 = vunpack.c.l.b16 %v400
        %v481 = vunpack.c.l.b16 %v401
        %v482 = vunpack.c.l.b16 %v402
        %v483 = vunpack.c.l.b16 %v403
        %v484 = vunpack.c.l.b16 %v404
        %v485 = vunpack.c.l.b16 %v405
        %v486 = vunpack.c.l.b16 %v406
        %v487 = vunpack.c.l.b16 %v407
        %v488 = vunpack.c.l.b16 %v408
        %v489 = vunpack.c.l.b16 %v409
        %v490 = vunpack.c.l.b16 %v410
        %v491 = vunpack.c.l.b16 %v411
        %v492 = vunpack.c.l.b16 %v412
        %v493 = vunpack.c.l.b16 %v413
        %v494 = vunpack.c.l.b16 %v414
        %v495 = vunpack.c.l.b16 %v415
        %v496 = vunpack.c.l.b16 %v416
        %v497 = vunpack.c.l.b16 %v417
        %v498 = vpack.c.b16 %v467, %v466
        %v499 = vpack.c.b16 %v469, %v468
        %v500 = vpack.c.b16 %v471, %v470
        %v501 = vpack.c.b16 %v473, %v472
        %v502 = vpack.c.b16 %v475, %v474
        %v503 = vpack.c.b16 %v477, %v476
        %v504 = vpack.c.b16 %v479, %v478
        %v505 = vpack.c.b16 %v481, %v480
        %v506 = vpack.c.b16 %v483, %v482
        %v507 = vpack.c.b16 %v485, %v484
        %v508 = vpack.c.b16 %v487, %v486
        %v509 = vpack.c.b16 %v489, %v488
        %v510 = vpack.c.b16 %v491, %v490
        %v511 = vpack.c.b16 %v493, %v492
        %v512 = vpack.c.b16 %v495, %v494
        %v513 = vpack.c.b16 %v497, %v496
        %530 = vmatprep.subr.bf16.mxu0 0
        %531 = vmatpush1.bf16.msra.mxu0 %v505
        %532 = vmatprep.subr.bf16.mxu0 0
        %533 = vmatpush1.bf16.msra.mxu0 %v504
        %534 = vmatprep.subr.bf16.mxu0 0
        %535 = vmatpush1.bf16.msra.mxu0 %v503
        %536 = vmatprep.subr.bf16.mxu0 0
        %537 = vmatpush1.bf16.msra.mxu0 %v502
        %538 = vmatprep.subr.bf16.mxu0 0
        %539 = vmatpush1.bf16.msra.mxu0 %v501
        %540 = vmatprep.subr.bf16.mxu0 0
        %541 = vmatpush1.bf16.msra.mxu0 %v500
        %542 = vmatprep.subr.bf16.mxu0 0
        %543 = vmatpush1.bf16.msra.mxu0 %v499
        %544 = vmatprep.subr.bf16.mxu0 0
        %545 = vmatpush1.bf16.msra.mxu0 %v498
        %546 = vmatprep.subr.bf16.mxu0 0
        %547 = vmatpush2.bf16.msra.mxu0 %v513
        %548 = vmatprep.subr.bf16.mxu0 0
        %549 = vmatpush2.bf16.msra.mxu0 %v512
        %550 = vmatprep.subr.bf16.mxu0 0
        %551 = vmatpush2.bf16.msra.mxu0 %v511
        %552 = vmatprep.subr.bf16.mxu0 0
        %553 = vmatpush2.bf16.msra.mxu0 %v510
        %554 = vmatprep.subr.bf16.mxu0 0
        %555 = vmatpush2.bf16.msra.mxu0 %v509
        %556 = vmatprep.subr.bf16.mxu0 0
        %557 = vmatpush2.bf16.msra.mxu0 %v508
        %558 = vmatprep.subr.bf16.mxu0 0
        %559 = vmatpush2.bf16.msra.mxu0 %v507
        %560 = vmatprep.subr.bf16.mxu0 0
        %561 = vmatpush2.bf16.msra.mxu0 %v506
        %562 = vmatprep.mubr.bf16.mxu0 %v366
        %563 = vmatmul.mubr.bf16.gmra.mxu0 %v365
        %v564 = vpop.f32.mrf.mxu0
        %v565 = vadd.f32 0.0, %v564
        %v566 = vpop.f32.mrf.mxu0
        %v567 = vpop.f32.mrf.mxu0
        %v568 = vadd.f32 0.0, %v567
        %v569 = vpop.f32.mrf.mxu0
        %570 = vmatprep.mubr.bf16.mxu0 %v368
        %571 = vmatmul.mubr.bf16.gmra.mxu0 %v367
        %v572 = vpop.f32.mrf.mxu0
        %v573 = vadd.f32 0.0, %v572
        %v574 = vpop.f32.mrf.mxu0
        %v575 = vpop.f32.mrf.mxu0
        %v576 = vadd.f32 0.0, %v575
        %v577 = vpop.f32.mrf.mxu0
        %578 = vmatprep.mubr.bf16.mxu0 %v370
        %579 = vmatmul.mubr.bf16.gmra.mxu0 %v369
        %v580 = vpop.f32.mrf.mxu0
        %v581 = vadd.f32 0.0, %v580
        %v582 = vpop.f32.mrf.mxu0
        %v583 = vpop.f32.mrf.mxu0
        %v584 = vadd.f32 0.0, %v583
        %v585 = vpop.f32.mrf.mxu0
        %586 = vmatprep.mubr.bf16.mxu0 %v372
        %587 = vmatmul.mubr.bf16.gmra.mxu0 %v371
        %v588 = vpop.f32.mrf.mxu0
        %v589 = vadd.f32 0.0, %v588
        %v590 = vpop.f32.mrf.mxu0
        %v591 = vpop.f32.mrf.mxu0
        %v592 = vadd.f32 0.0, %v591
        %v593 = vpop.f32.mrf.mxu0
        %594 = vmatprep.mubr.bf16.mxu0 %v374
        %595 = vmatmul.mubr.bf16.gmra.mxu0 %v373
        %v596 = vpop.f32.mrf.mxu0
        %v597 = vadd.f32 0.0, %v596
        %v598 = vpop.f32.mrf.mxu0
        %v599 = vpop.f32.mrf.mxu0
        %v600 = vadd.f32 0.0, %v599
        %v601 = vpop.f32.mrf.mxu0
        %602 = vmatprep.mubr.bf16.mxu0 %v376
        %603 = vmatmul.mubr.bf16.gmra.mxu0 %v375
        %v604 = vpop.f32.mrf.mxu0
        %v605 = vadd.f32 0.0, %v604
        %v606 = vpop.f32.mrf.mxu0
        %v607 = vpop.f32.mrf.mxu0
        %v608 = vadd.f32 0.0, %v607
        %v609 = vpop.f32.mrf.mxu0
        %610 = vmatprep.mubr.bf16.mxu0 %v378
        %611 = vmatmul.mubr.bf16.gmra.mxu0 %v377
        %v612 = vpop.f32.mrf.mxu0
        %v613 = vadd.f32 0.0, %v612
        %v614 = vpop.f32.mrf.mxu0
        %v615 = vpop.f32.mrf.mxu0
        %v616 = vadd.f32 0.0, %v615
        %v617 = vpop.f32.mrf.mxu0
        %618 = vmatprep.mubr.bf16.mxu0 %v380
        %619 = vmatmul.mubr.bf16.gmra.mxu0 %v379
        %v620 = vpop.f32.mrf.mxu0
        %v621 = vadd.f32 0.0, %v620
        %v622 = vpop.f32.mrf.mxu0
        %v623 = vpop.f32.mrf.mxu0
        %v624 = vadd.f32 0.0, %v623
        %v625 = vpop.f32.mrf.mxu0
        %626 = vdwg.mxu0
        %v627 = vadd.f32 %v418, %v565
        %v628 = vadd.f32 %v419, %v568
        %v629 = vadd.f32 %v420, %v573
        %v630 = vadd.f32 %v421, %v576
        %v631 = vadd.f32 %v422, %v581
        %v632 = vadd.f32 %v423, %v584
        %v633 = vadd.f32 %v424, %v589
        %v634 = vadd.f32 %v425, %v592
        %v635 = vadd.f32 %v426, %v597
        %v636 = vadd.f32 %v427, %v600
        %v637 = vadd.f32 %v428, %v605
        %v638 = vadd.f32 %v429, %v608
        %v639 = vadd.f32 %v430, %v613
        %v640 = vadd.f32 %v431, %v616
        %v641 = vadd.f32 %v432, %v621
        %v642 = vadd.f32 %v433, %v624
        %643 = vst [vmem:[#allocation2] sm:$0xff] %v627
        %644 = vst [vmem:[#allocation2 + $0x8] sm:$0xff] %v628
        %645 = vst [vmem:[#allocation2 + $0x10] sm:$0xff] %v629
        %646 = vst [vmem:[#allocation2 + $0x18] sm:$0xff] %v630
        %647 = vst [vmem:[#allocation2 + $0x20] sm:$0xff] %v631
        %648 = vst [vmem:[#allocation2 + $0x28] sm:$0xff] %v632
        %649 = vst [vmem:[#allocation2 + $0x30] sm:$0xff] %v633
        %650 = vst [vmem:[#allocation2 + $0x38] sm:$0xff] %v634
        %651 = vst [vmem:[#allocation2 + $0x40] sm:$0xff] %v635
        %652 = vst [vmem:[#allocation2 + $0x48] sm:$0xff] %v636
        %653 = vst [vmem:[#allocation2 + $0x50] sm:$0xff] %v637
        %654 = vst [vmem:[#allocation2 + $0x58] sm:$0xff] %v638
        %655 = vst [vmem:[#allocation2 + $0x60] sm:$0xff] %v639
        %656 = vst [vmem:[#allocation2 + $0x68] sm:$0xff] %v640
        %657 = vst [vmem:[#allocation2 + $0x70] sm:$0xff] %v641
        %658 = vst [vmem:[#allocation2 + $0x78] sm:$0xff] %v642
        // Predicated region
        $region57: #{tpu_custom_call.1} parent=39 // pred_check
          %p659 = pneg %p337
        $region58: #{tpu_custom_call.1} parent=39 // pred_check_branch
          %661 = sbr.rel (%p659) target = $region60
        $region59: #{tpu_custom_call.1} parent=39 // pred_region
          %v662 = vld [vmem:[#allocation2] sm:$0xff]
          %v663 = vld [vmem:[#allocation2 + $0x8] sm:$0xff]
          %v664 = vld [vmem:[#allocation2 + $0x10] sm:$0xff]
          %v665 = vld [vmem:[#allocation2 + $0x18] sm:$0xff]
          %v666 = vld [vmem:[#allocation2 + $0x20] sm:$0xff]
          %v667 = vld [vmem:[#allocation2 + $0x28] sm:$0xff]
          %v668 = vld [vmem:[#allocation2 + $0x30] sm:$0xff]
          %v669 = vld [vmem:[#allocation2 + $0x38] sm:$0xff]
          %v670 = vld [vmem:[#allocation2 + $0x40] sm:$0xff]
          %v671 = vld [vmem:[#allocation2 + $0x48] sm:$0xff]
          %v672 = vld [vmem:[#allocation2 + $0x50] sm:$0xff]
          %v673 = vld [vmem:[#allocation2 + $0x58] sm:$0xff]
          %v674 = vld [vmem:[#allocation2 + $0x60] sm:$0xff]
          %v675 = vld [vmem:[#allocation2 + $0x68] sm:$0xff]
          %v676 = vld [vmem:[#allocation2 + $0x70] sm:$0xff]
          %v677 = vld [vmem:[#allocation2 + $0x78] sm:$0xff]
          %v678 = vld [vmem:[%s327] sm:$0xff]
          %v679 = vld [vmem:[%s327 + $0x8] sm:$0xff]
          %v680 = vld [vmem:[%s327 + $0x10] sm:$0xff]
          %v681 = vld [vmem:[%s327 + $0x18] sm:$0xff]
          %v682 = vld [vmem:[%s327 + $0x20] sm:$0xff]
          %v683 = vld [vmem:[%s327 + $0x28] sm:$0xff]
          %v684 = vld [vmem:[%s327 + $0x30] sm:$0xff]
          %v685 = vld [vmem:[%s327 + $0x38] sm:$0xff]
          %v686 = vld [vmem:[%s327 + $0x40] sm:$0xff]
          %v687 = vld [vmem:[%s327 + $0x48] sm:$0xff]
          %v688 = vld [vmem:[%s327 + $0x50] sm:$0xff]
          %v689 = vld [vmem:[%s327 + $0x58] sm:$0xff]
          %v690 = vld [vmem:[%s327 + $0x60] sm:$0xff]
          %v691 = vld [vmem:[%s327 + $0x68] sm:$0xff]
          %v692 = vld [vmem:[%s327 + $0x70] sm:$0xff]
          %v693 = vld [vmem:[%s327 + $0x78] sm:$0xff]
          %695 = vset.pattern.permute.xlu0 0
          %696 = vperm.xlu0 %695, %v678
          %v697 = vpop.permute.xlu0 %696
          %700 = vset.pattern.permute.xlu0 0
          %701 = vperm.xlu0 %700, %v679
          %v702 = vpop.permute.xlu0 %701
          %705 = vset.pattern.permute.xlu0 0
          %706 = vperm.xlu0 %705, %v680
          %v707 = vpop.permute.xlu0 %706
          %710 = vset.pattern.permute.xlu0 0
          %711 = vperm.xlu0 %710, %v681
          %v712 = vpop.permute.xlu0 %711
          %715 = vset.pattern.permute.xlu0 0
          %716 = vperm.xlu0 %715, %v682
          %v717 = vpop.permute.xlu0 %716
          %720 = vset.pattern.permute.xlu0 0
          %721 = vperm.xlu0 %720, %v683
          %v722 = vpop.permute.xlu0 %721
          %725 = vset.pattern.permute.xlu0 0
          %726 = vperm.xlu0 %725, %v684
          %v727 = vpop.permute.xlu0 %726
          %730 = vset.pattern.permute.xlu0 0
          %731 = vperm.xlu0 %730, %v685
          %v732 = vpop.permute.xlu0 %731
          %735 = vset.pattern.permute.xlu0 0
          %736 = vperm.xlu0 %735, %v686
          %v737 = vpop.permute.xlu0 %736
          %740 = vset.pattern.permute.xlu0 0
          %741 = vperm.xlu0 %740, %v687
          %v742 = vpop.permute.xlu0 %741
          %745 = vset.pattern.permute.xlu0 0
          %746 = vperm.xlu0 %745, %v688
          %v747 = vpop.permute.xlu0 %746
          %750 = vset.pattern.permute.xlu0 0
          %751 = vperm.xlu0 %750, %v689
          %v752 = vpop.permute.xlu0 %751
          %755 = vset.pattern.permute.xlu0 0
          %756 = vperm.xlu0 %755, %v690
          %v757 = vpop.permute.xlu0 %756
          %760 = vset.pattern.permute.xlu0 0
          %761 = vperm.xlu0 %760, %v691
          %v762 = vpop.permute.xlu0 %761
          %765 = vset.pattern.permute.xlu0 0
          %766 = vperm.xlu0 %765, %v692
          %v767 = vpop.permute.xlu0 %766
          %770 = vset.pattern.permute.xlu0 0
          %771 = vperm.xlu0 %770, %v693
          %v772 = vpop.permute.xlu0 %771
          %v774 = vmul.f32 %v662, %v697
          %v775 = vmul.f32 %v663, %v702
          %v776 = vmul.f32 %v664, %v707
          %v777 = vmul.f32 %v665, %v712
          %v778 = vmul.f32 %v666, %v717
          %v779 = vmul.f32 %v667, %v722
          %v780 = vmul.f32 %v668, %v727
          %v781 = vmul.f32 %v669, %v732
          %v782 = vmul.f32 %v670, %v737
          %v783 = vmul.f32 %v671, %v742
          %v784 = vmul.f32 %v672, %v747
          %v785 = vmul.f32 %v673, %v752
          %v786 = vmul.f32 %v674, %v757
          %v787 = vmul.f32 %v675, %v762
          %v788 = vmul.f32 %v676, %v767
          %v789 = vmul.f32 %v677, %v772
          %v790 = vpack.c.bf16 %v775, %v774
          %v791 = vpack.c.bf16 %v777, %v776
          %v792 = vpack.c.bf16 %v779, %v778
          %v793 = vpack.c.bf16 %v781, %v780
          %v794 = vpack.c.bf16 %v783, %v782
          %v795 = vpack.c.bf16 %v785, %v784
          %v796 = vpack.c.bf16 %v787, %v786
          %v797 = vpack.c.bf16 %v789, %v788
          %v798 = vld [vmem:[#allocation8] sm:$0xf]
          %v799 = vld [vmem:[#allocation8 + $0x4] sm:$0xf]
          %v800 = vld [vmem:[#allocation8 + $0x8] sm:$0xf]
          %v801 = vld [vmem:[#allocation8 + $0xc] sm:$0xf]
          %v802 = vld [vmem:[#allocation8 + $0x10] sm:$0xf]
          %v803 = vld [vmem:[#allocation8 + $0x14] sm:$0xf]
          %v804 = vld [vmem:[#allocation8 + $0x18] sm:$0xf]
          %v805 = vld [vmem:[#allocation8 + $0x1c] sm:$0xf]
          %v806 = vld [vmem:[#allocation8 + $0x20] sm:$0xf]
          %v807 = vld [vmem:[#allocation8 + $0x24] sm:$0xf]
          %v808 = vld [vmem:[#allocation8 + $0x28] sm:$0xf]
          %v809 = vld [vmem:[#allocation8 + $0x2c] sm:$0xf]
          %v810 = vld [vmem:[#allocation8 + $0x30] sm:$0xf]
          %v811 = vld [vmem:[#allocation8 + $0x34] sm:$0xf]
          %v812 = vld [vmem:[#allocation8 + $0x38] sm:$0xf]
          %v813 = vld [vmem:[#allocation8 + $0x3c] sm:$0xf]
          %v814 = vld [vmem:[%s333] sm:$0xff]
          %v815 = vld [vmem:[%s333 + $0x8] sm:$0xff]
          %v816 = vld [vmem:[%s333 + $0x10] sm:$0xff]
          %v817 = vld [vmem:[%s333 + $0x18] sm:$0xff]
          %v818 = vld [vmem:[%s333 + $0x20] sm:$0xff]
          %v819 = vld [vmem:[%s333 + $0x28] sm:$0xff]
          %v820 = vld [vmem:[%s333 + $0x30] sm:$0xff]
          %v821 = vld [vmem:[%s333 + $0x38] sm:$0xff]
          %v822 = vld [vmem:[%s333 + $0x40] sm:$0xff]
          %v823 = vld [vmem:[%s333 + $0x48] sm:$0xff]
          %v824 = vld [vmem:[%s333 + $0x50] sm:$0xff]
          %v825 = vld [vmem:[%s333 + $0x58] sm:$0xff]
          %v826 = vld [vmem:[%s333 + $0x60] sm:$0xff]
          %v827 = vld [vmem:[%s333 + $0x68] sm:$0xff]
          %v828 = vld [vmem:[%s333 + $0x70] sm:$0xff]
          %v829 = vld [vmem:[%s333 + $0x78] sm:$0xff]
          %v846 = vunpack.c.l.b16 %v798
          %v847 = vunpack.c.l.b16 %v799
          %v848 = vunpack.c.l.b16 %v800
          %v849 = vunpack.c.l.b16 %v801
          %v850 = vunpack.c.l.b16 %v802
          %v851 = vunpack.c.l.b16 %v803
          %v852 = vunpack.c.l.b16 %v804
          %v853 = vunpack.c.l.b16 %v805
          %v854 = vunpack.c.l.b16 %v806
          %v855 = vunpack.c.l.b16 %v807
          %v856 = vunpack.c.l.b16 %v808
          %v857 = vunpack.c.l.b16 %v809
          %v858 = vunpack.c.l.b16 %v810
          %v859 = vunpack.c.l.b16 %v811
          %v860 = vunpack.c.l.b16 %v812
          %v861 = vunpack.c.l.b16 %v813
          %v862 = vpack.c.b16 %v847, %v846
          %v863 = vpack.c.b16 %v849, %v848
          %v864 = vpack.c.b16 %v851, %v850
          %v865 = vpack.c.b16 %v853, %v852
          %v866 = vpack.c.b16 %v855, %v854
          %v867 = vpack.c.b16 %v857, %v856
          %v868 = vpack.c.b16 %v859, %v858
          %v869 = vpack.c.b16 %v861, %v860
          %878 = vmatprep.subr.bf16.mxu0 0
          %879 = vmatpush1.bf16.msra.mxu0 %v869
          %880 = vmatprep.subr.bf16.mxu0 0
          %881 = vmatpush1.bf16.msra.mxu0 %v868
          %882 = vmatprep.subr.bf16.mxu0 0
          %883 = vmatpush1.bf16.msra.mxu0 %v867
          %884 = vmatprep.subr.bf16.mxu0 0
          %885 = vmatpush1.bf16.msra.mxu0 %v866
          %886 = vmatprep.subr.bf16.mxu0 0
          %887 = vmatpush1.bf16.msra.mxu0 %v865
          %888 = vmatprep.subr.bf16.mxu0 0
          %889 = vmatpush1.bf16.msra.mxu0 %v864
          %890 = vmatprep.subr.bf16.mxu0 0
          %891 = vmatpush1.bf16.msra.mxu0 %v863
          %892 = vmatprep.subr.bf16.mxu0 0
          %893 = vmatpush1.bf16.msra.mxu0 %v862
          %894 = vmatprep.subr.bf16.mxu0 0
          %895 = vmatpush2.bf16.msra.mxu0 0
          %896 = vmatprep.subr.bf16.mxu0 0
          %897 = vmatpush2.bf16.msra.mxu0 0
          %898 = vmatprep.subr.bf16.mxu0 0
          %899 = vmatpush2.bf16.msra.mxu0 0
          %900 = vmatprep.subr.bf16.mxu0 0
          %901 = vmatpush2.bf16.msra.mxu0 0
          %902 = vmatprep.subr.bf16.mxu0 0
          %903 = vmatpush2.bf16.msra.mxu0 0
          %904 = vmatprep.subr.bf16.mxu0 0
          %905 = vmatpush2.bf16.msra.mxu0 0
          %906 = vmatprep.subr.bf16.mxu0 0
          %907 = vmatpush2.bf16.msra.mxu0 0
          %908 = vmatprep.subr.bf16.mxu0 0
          %909 = vmatpush2.bf16.msra.mxu0 0
          %910 = vmatprep.mubr.bf16.mxu0 0
          %911 = vmatmul.mubr.bf16.gmra.mxu0 %v790
          %v912 = vpop.f32.mrf.mxu0
          %v913 = vadd.f32 %v814, %v912
          %v914 = vpop.f32.mrf.mxu0
          %v915 = vpop.f32.mrf.mxu0
          %v916 = vadd.f32 %v815, %v915
          %v917 = vpop.f32.mrf.mxu0
          %918 = vmatprep.mubr.bf16.mxu0 0
          %919 = vmatmul.mubr.bf16.gmra.mxu0 %v791
          %v920 = vpop.f32.mrf.mxu0
          %v921 = vadd.f32 %v816, %v920
          %v922 = vpop.f32.mrf.mxu0
          %v923 = vpop.f32.mrf.mxu0
          %v924 = vadd.f32 %v817, %v923
          %v925 = vpop.f32.mrf.mxu0
          %926 = vmatprep.mubr.bf16.mxu0 0
          %927 = vmatmul.mubr.bf16.gmra.mxu0 %v792
          %v928 = vpop.f32.mrf.mxu0
          %v929 = vadd.f32 %v818, %v928
          %v930 = vpop.f32.mrf.mxu0
          %v931 = vpop.f32.mrf.mxu0
          %v932 = vadd.f32 %v819, %v931
          %v933 = vpop.f32.mrf.mxu0
          %934 = vmatprep.mubr.bf16.mxu0 0
          %935 = vmatmul.mubr.bf16.gmra.mxu0 %v793
          %v936 = vpop.f32.mrf.mxu0
          %v937 = vadd.f32 %v820, %v936
          %v938 = vpop.f32.mrf.mxu0
          %v939 = vpop.f32.mrf.mxu0
          %v940 = vadd.f32 %v821, %v939
          %v941 = vpop.f32.mrf.mxu0
          %942 = vmatprep.mubr.bf16.mxu0 0
          %943 = vmatmul.mubr.bf16.gmra.mxu0 %v794
          %v944 = vpop.f32.mrf.mxu0
          %v945 = vadd.f32 %v822, %v944
          %v946 = vpop.f32.mrf.mxu0
          %v947 = vpop.f32.mrf.mxu0
          %v948 = vadd.f32 %v823, %v947
          %v949 = vpop.f32.mrf.mxu0
          %950 = vmatprep.mubr.bf16.mxu0 0
          %951 = vmatmul.mubr.bf16.gmra.mxu0 %v795
          %v952 = vpop.f32.mrf.mxu0
          %v953 = vadd.f32 %v824, %v952
          %v954 = vpop.f32.mrf.mxu0
          %v955 = vpop.f32.mrf.mxu0
          %v956 = vadd.f32 %v825, %v955
          %v957 = vpop.f32.mrf.mxu0
          %958 = vmatprep.mubr.bf16.mxu0 0
          %959 = vmatmul.mubr.bf16.gmra.mxu0 %v796
          %v960 = vpop.f32.mrf.mxu0
          %v961 = vadd.f32 %v826, %v960
          %v962 = vpop.f32.mrf.mxu0
          %v963 = vpop.f32.mrf.mxu0
          %v964 = vadd.f32 %v827, %v963
          %v965 = vpop.f32.mrf.mxu0
          %966 = vmatprep.mubr.bf16.mxu0 0
          %967 = vmatmul.mubr.bf16.gmra.mxu0 %v797
          %v968 = vpop.f32.mrf.mxu0
          %v969 = vadd.f32 %v828, %v968
          %v970 = vpop.f32.mrf.mxu0
          %v971 = vpop.f32.mrf.mxu0
          %v972 = vadd.f32 %v829, %v971
          %v973 = vpop.f32.mrf.mxu0
          %974 = vdwg.mxu0
          %v975 = vmax.f32 %v913, 0.0
          %v976 = vmax.f32 %v916, 0.0
          %v977 = vmax.f32 %v921, 0.0
          %v978 = vmax.f32 %v924, 0.0
          %v979 = vmax.f32 %v929, 0.0
          %v980 = vmax.f32 %v932, 0.0
          %v981 = vmax.f32 %v937, 0.0
          %v982 = vmax.f32 %v940, 0.0
          %v983 = vmax.f32 %v945, 0.0
          %v984 = vmax.f32 %v948, 0.0
          %v985 = vmax.f32 %v953, 0.0
          %v986 = vmax.f32 %v956, 0.0
          %v987 = vmax.f32 %v961, 0.0
          %v988 = vmax.f32 %v964, 0.0
          %v989 = vmax.f32 %v969, 0.0
          %v990 = vmax.f32 %v972, 0.0
          %v991 = vpack.c.bf16 %v976, %v975
          %v992 = vpack.c.bf16 %v978, %v977
          %v993 = vpack.c.bf16 %v980, %v979
          %v994 = vpack.c.bf16 %v982, %v981
          %v995 = vpack.c.bf16 %v984, %v983
          %v996 = vpack.c.bf16 %v986, %v985
          %v997 = vpack.c.bf16 %v988, %v987
          %v998 = vpack.c.bf16 %v990, %v989
          %v1007 = vunpack.c.l.b16 %v991
          %v1008 = vunpack.c.h.b16 %v991
          %v1009 = vunpack.c.l.b16 %v992
          %v1010 = vunpack.c.h.b16 %v992
          %v1011 = vunpack.c.l.b16 %v993
          %v1012 = vunpack.c.h.b16 %v993
          %v1013 = vunpack.c.l.b16 %v994
          %v1014 = vunpack.c.h.b16 %v994
          %v1015 = vunpack.c.l.b16 %v995
          %v1016 = vunpack.c.h.b16 %v995
          %v1017 = vunpack.c.l.b16 %v996
          %v1018 = vunpack.c.h.b16 %v996
          %v1019 = vunpack.c.l.b16 %v997
          %v1020 = vunpack.c.h.b16 %v997
          %v1021 = vunpack.c.l.b16 %v998
          %v1022 = vunpack.c.h.b16 %v998
          %v1023 = vpack.c.b16 %v1007, %v1007
          %v1024 = vpack.c.b16 %v1008, %v1008
          %v1025 = vpack.c.b16 %v1009, %v1009
          %v1026 = vpack.c.b16 %v1010, %v1010
          %v1027 = vpack.c.b16 %v1011, %v1011
          %v1028 = vpack.c.b16 %v1012, %v1012
          %v1029 = vpack.c.b16 %v1013, %v1013
          %v1030 = vpack.c.b16 %v1014, %v1014
          %v1031 = vpack.c.b16 %v1015, %v1015
          %v1032 = vpack.c.b16 %v1016, %v1016
          %v1033 = vpack.c.b16 %v1017, %v1017
          %v1034 = vpack.c.b16 %v1018, %v1018
          %v1035 = vpack.c.b16 %v1019, %v1019
          %v1036 = vpack.c.b16 %v1020, %v1020
          %v1037 = vpack.c.b16 %v1021, %v1021
          %v1038 = vpack.c.b16 %v1022, %v1022
          %1055 = vst [vmem:[%s320] sm:$0xf] %v1023
          %1056 = vst [vmem:[%s320 + $0x4] sm:$0xf] %v1024
          %1057 = vst [vmem:[%s320 + $0x8] sm:$0xf] %v1025
          %1058 = vst [vmem:[%s320 + $0xc] sm:$0xf] %v1026
          %1059 = vst [vmem:[%s320 + $0x10] sm:$0xf] %v1027
          %1060 = vst [vmem:[%s320 + $0x14] sm:$0xf] %v1028
          %1061 = vst [vmem:[%s320 + $0x18] sm:$0xf] %v1029
          %1062 = vst [vmem:[%s320 + $0x1c] sm:$0xf] %v1030
          %1063 = vst [vmem:[%s320 + $0x20] sm:$0xf] %v1031
          %1064 = vst [vmem:[%s320 + $0x24] sm:$0xf] %v1032
          %1065 = vst [vmem:[%s320 + $0x28] sm:$0xf] %v1033
          %1066 = vst [vmem:[%s320 + $0x2c] sm:$0xf] %v1034
          %1067 = vst [vmem:[%s320 + $0x30] sm:$0xf] %v1035
          %1068 = vst [vmem:[%s320 + $0x34] sm:$0xf] %v1036
          %1069 = vst [vmem:[%s320 + $0x38] sm:$0xf] %v1037
          %1070 = vst [vmem:[%s320 + $0x3c] sm:$0xf] %v1038
        $region60: #{tpu_custom_call.1} parent=39 // pred_fallthru
          _
        %s1071 = sand.u32 %s165, 1
        %s1072 = scalar_lea.sflag [#allocation5], %s1071
        %s1073 = sand.u32 %s165, 1
        %s1074 = smul.addr %s1073, 64
        %s1075 = scalar_lea.vmem [#allocation9], %s1074
        // Predicated region
        $region61: #{tpu_custom_call.1} parent=39 // pred_check
          %p1076 = pneg %p175
        $region62: #{tpu_custom_call.1} parent=39 // pred_check_branch
          %1078 = sbr.rel (%p1076) target = $region64
        $region63: #{tpu_custom_call.1} parent=39 // pred_region
          %s1079 = smul.u32 16, %s27
          %s1081 = ssub.s32 1024, 1024
          %1082 = vsyncadd %s1072, %s1081
          %s1083 = smul.addr %s1079, 64
          %s1084 = scalar_lea.hbm %s5, %s1083
          %s1085 = sshll.u32 %s1075, 4
          %s1086 = int_to_ptr.vmem [resolvable:$true] %s1085
          %1091 = dma.vmem_to_hbm [thread:$0]  %s1086, 1024, %s1084, %s1072, 64, 64, 4
        $region64: #{tpu_custom_call.1} parent=39 // pred_fallthru
          _
      $region40: #{tpu_custom_call.1} parent=5 // pred_fallthru
        _
      %p1092 = scmp.le.s32.totalorder 2, %s18
      // Predicated region
      $region65: #{tpu_custom_call.1} parent=5 // pred_check
        %p1093 = pneg %p1092
      $region66: #{tpu_custom_call.1} parent=5 // pred_check_branch
        %1095 = sbr.rel (%p1093) target = $region68
      $region67: #{tpu_custom_call.1} parent=5 // pred_region
        %s1096 = ssub.s32 %s18, 2
        // Predicated region
        $region69: #{tpu_custom_call.1} parent=67 // pred_check
          %p1097 = pneg %p181
        $region70: #{tpu_custom_call.1} parent=67 // pred_check_branch
          %1099 = sbr.rel (%p1097) target = $region72
        $region71: #{tpu_custom_call.1} parent=67 // pred_region
          %s1100 = sand.u32 %s166, 1
          %s1101 = scalar_lea.sflag [#allocation5], %s1100
          %s1102 = sand.u32 %s166, 1
          %s1103 = smul.addr %s1102, 64
          %s1104 = scalar_lea.vmem [#allocation9], %s1103
          %1105 = dma.done %s1101, 1024
        $region72: #{tpu_custom_call.1} parent=67 // pred_fallthru
          _
      $region68: #{tpu_custom_call.1} parent=5 // pred_fallthru
        _
    $region6: #{tpu_custom_call.1} parent=1 // loop_footer
      %s22 = sadd.s32 1, %s18
    $region7: #{tpu_custom_call.1} parent=1 // loop_footer_branch
      %17 = sbr.rel target = $region3
    $region8: #{tpu_custom_call.1} parent=1 // loop_exit
      _
    %1106 = vsyncpa [#allocation4], 1
    %s1107 = scalar_lea.sflag [#allocation4], 1
    %1108 = vsyncpa %s1107, 1
    %1109 = vsyncpa [#allocation7], 1
    %1110 = vsyncpa [#allocation5], 1
    %s1111 = scalar_lea.sflag [#allocation5], 1
    %1112 = vsyncpa %s1111, 1

</llo_original>
